<compile_context>
chip_gen: v5e
topology: v5e:2x2
jax: 0.10.0
libtpu: 0.0.40
codegen_flags: <defaults>
</compile_context>

<pallas_src>
import jax
import jax.numpy as jnp
import numpy as np
from jax.experimental import pallas as pl
from jax.experimental.pallas import tpu as pltpu


def _bypass_copy_kernel(x_ref, o_ref):
    # Pure identity on the current (block_rows, cols) tile.
    o_ref[...] = x_ref[...]


def _choose_layout(total, last_dim, itemsize, target_block_bytes):
    """Pick a lane-dense (rows, cols) view of the flat array and a row-block size."""
    # Lane-dense columns: largest multiple of 128 that divides the flat size.
    cols = None
    for c in (8192, 4096, 2048, 1024, 512, 256, 128):
        if total % c == 0:
            cols = c
            break
    if cols is None:
        # Fall back to the original hidden dim (full-dim block is always legal).
        cols = last_dim
    rows = total // cols

    # Row block sized to ~target_block_bytes: big enough to amortize per-step
    # overhead, small enough that 2x(in) + 2x(out) double-buffering fits in the
    # scoped-VMEM default on every TPU generation.
    cap = max(8, target_block_bytes // max(1, cols * itemsize))
    if rows <= cap:
        block_rows = rows            # full sublane dim -> always a legal block
    else:
        # Multiple of 32 satisfies the sublane tiling rule for f32/bf16/int8.
        block_rows = max(32, (cap // 32) * 32)
        if block_rows >= rows:
            block_rows = rows
    return rows, cols, block_rows


def bypass_block(x, embed_mask=None, layer_mask=None, *,
                 target_block_bytes=2 * 1024 * 1024):
    """Pallas implementation of BypassBlock.forward.

    Returns (x, embed_mask, layer_mask) with x routed through a large-tile,
    lane-dense identity Pallas kernel whose output may alias its input.
    """
    total = int(np.prod(x.shape))
    itemsize = jnp.dtype(x.dtype).itemsize
    rows, cols, block_rows = _choose_layout(total, x.shape[-1], itemsize,
                                            target_block_bytes)

    x2 = x.reshape(rows, cols)
    grid_rows = pl.cdiv(rows, block_rows)   # partial trailing block handled by Pallas

    out2 = pl.pallas_call(
        _bypass_copy_kernel,
        out_shape=jax.ShapeDtypeStruct((rows, cols), x.dtype),
        grid=(grid_rows,),
        in_specs=[pl.BlockSpec((block_rows, cols), lambda i: (i, 0))],
        out_specs=pl.BlockSpec((block_rows, cols), lambda i: (i, 0)),
        # Identity copy: let XLA alias (and, under a donating jit, elide) the
        # output buffer instead of materializing a second (B*N*D) array in HBM.
        input_output_aliases={0: 0},
        compiler_params=pltpu.CompilerParams(
            dimension_semantics=("parallel",),
        ),
    )(x2)

    return out2.reshape(x.shape), embed_mask, layer_mask


if __name__ == "__main__":
    key = jax.random.PRNGKey(0)
    k_x, k_m = jax.random.split(key)

    # Small transformer-style activation shapes: batch=2, seq=8, hidden=32.
    x = jax.random.normal(k_x, (2, 8, 32), dtype=jnp.float32)
    embed_mask = jax.random.bernoulli(k_m, 0.5, (32,)).astype(jnp.float32)
    layer_mask = None  # BypassBlock commonly receives None here.

    # Snapshot reference values before the call (robust even if buffers alias).
    x_snapshot = np.asarray(x)

    out_x, out_embed_mask, out_layer_mask = bypass_block(x, embed_mask, layer_mask)
    jax.block_until_ready(out_x)

    assert out_x.shape == x_snapshot.shape and out_x.dtype == jnp.float32
    assert np.array_equal(np.asarray(out_x), x_snapshot)
    assert out_embed_mask is embed_mask
    assert out_layer_mask is layer_mask

    print("KERNEL_OK")
</pallas_src>

<mosaic_0001>
module attributes {stable_mosaic.version = 11 : i64} {
  func.func @_bypass_copy_kernel(%arg0: i32, %arg1: memref<1x512xf32, #tpu.memory_space<vmem>>, %arg2: memref<1x512xf32, #tpu.memory_space<vmem>>) attributes {dimension_semantics = [#tpu.dimension_semantics<parallel>], iteration_bounds = array<i64: 1>, scalar_prefetch = 0 : i64, scratch_operands = 0 : i64, tpu.core_type = #tpu.core_type<tc>, window_params = [{transform_indices = @transform_0, window_bounds = array<i64: 1, 512>}, {transform_indices = @transform_1, window_bounds = array<i64: 1, 512>}]} {
    %c0 = arith.constant 0 : index
    %c0_0 = arith.constant 0 : index
    %0 = vector.load %arg1[%c0, %c0_0] : memref<1x512xf32, #tpu.memory_space<vmem>>, vector<1x512xf32>
    %c0_1 = arith.constant 0 : index
    %c0_2 = arith.constant 0 : index
    %1 = vector.load %arg2[%c0_1, %c0_2] : memref<1x512xf32, #tpu.memory_space<vmem>>, vector<1x512xf32>
    tpu.vector_store %arg2[%c0_1, %c0_2], %0 {strides = array<i32>} : memref<1x512xf32, #tpu.memory_space<vmem>>, vector<1x512xf32>,
    return
  }
  func.func @transform_0(%arg0: i32) -> (i32, i32) {
    %c0_i32 = arith.constant 0 : i32
    %c0_i32_0 = arith.constant 0 : i32
    return %arg0, %c0_i32 : i32, i32
  }
  func.func @transform_1(%arg0: i32) -> (i32, i32) {
    %c0_i32 = arith.constant 0 : i32
    %c0_i32_0 = arith.constant 0 : i32
    return %arg0, %c0_i32 : i32, i32
  }
}

</mosaic_0001>

<llo_original>
// kernel: tpu_custom_call.1
$region0: #{tpu_custom_call.1}
  #allocation0 [shape = 'u32[]', space=smem, size = 0x4, offset = 0x4, fixed_abs, tag = 'smem constant byte address 0x4 - core index']
  #allocation1 [shape = 'u32[72,128]{1,0:T(1,128)}', space=vmem, size = 0x9000, scoped, tag = 'internal scratch']
  %s0 = inlined_call_operand.hbm [shape: f32[1,512], index: 0, kind: input, shape index: {}, may-alias: {0,1}]
  %s1 = inlined_call_operand.hbm [shape: f32[1,512], index: 1, kind: output, shape index: {}, may-alias: {0,1}]
  %s2 = sld [smem:[#allocation0]]
  $region18: #{tpu_custom_call.1} parent=0
    _
  %s4 = ssub.s32 1, %s2
  %s5 = scalar_select 0, %s4, %s2
  $region1: #{tpu_custom_call.1} parent=0
    #allocation2 [shape = 'u8[2048]{0}', space=vmem, size = 0x800, scoped, tag = 'input window, operand 0, single buffered']
    #allocation3 [shape = 's32[1]{0}', space=sflag, size = 0x4, scoped, tag = 'scoped memory for tpu_custom_call.1']
    #allocation4 [shape = 's32[1]{0}', space=sflag, size = 0x4, scoped, tag = 'scoped memory for tpu_custom_call.1']
    #allocation5 [shape = 'u8[2048]{0}', space=vmem, size = 0x800, scoped, tag = 'output window, operand 0, single buffered']
    %6 = vsyncpa [#allocation3], 0
    %7 = vsyncpa [#allocation4], 0
    // Predicated region
    $region2: #{tpu_custom_call.1} parent=1 // pred_check
      _
    $region3: #{tpu_custom_call.1} parent=1 // pred_check_branch
      %9 = sbr.rel (0) target = $region5
    $region4: #{tpu_custom_call.1} parent=1 // pred_region
      %11 = vsyncadd [#allocation3], 0
      %s13 = sshll.u32 %s0, 4
      %s14 = int_to_ptr.hbm [resolvable:$true] %s13
      %s15 = sshll.u32 [#allocation2], 4
      %s16 = int_to_ptr.vmem [resolvable:$true] %s15
      %18 = dma.hbm_to_vmem [thread:$0]  %s14, 64, %s16, [#allocation3]
    $region5: #{tpu_custom_call.1} parent=1 // pred_fallthru
      _
    // Predicated region
    $region6: #{tpu_custom_call.1} parent=1 // pred_check
      _
    $region7: #{tpu_custom_call.1} parent=1 // pred_check_branch
      %20 = sbr.rel (0) target = $region9
    $region8: #{tpu_custom_call.1} parent=1 // pred_region
      %22 = dma.done [#allocation3], 64
    $region9: #{tpu_custom_call.1} parent=1 // pred_fallthru
      _
    %v23 = vld [vmem:[#allocation2] sm:$0xf]
    %v24 = vlaneseq
    %vm25 = vcmp.ge.s32.totalorder %v24, 0
    %vm26 = vcmp.lt.s32.totalorder %v24, 512
    %vm27 = vmand %vm25, %vm26
    %28 = vst.msk [vmem:[#allocation5] sm:$0xf] %vm27, %v23
    // Predicated region
    $region10: #{tpu_custom_call.1} parent=1 // pred_check
      _
    $region11: #{tpu_custom_call.1} parent=1 // pred_check_branch
      %30 = sbr.rel (0) target = $region13
    $region12: #{tpu_custom_call.1} parent=1 // pred_region
      %32 = vsyncadd [#allocation4], 0
      %s34 = sshll.u32 [#allocation5], 4
      %s35 = int_to_ptr.vmem [resolvable:$true] %s34
      %s36 = sshll.u32 %s1, 4
      %s37 = int_to_ptr.hbm [resolvable:$true] %s36
      %39 = dma.vmem_to_hbm [thread:$0]  %s35, 64, %s37, [#allocation4]
    $region13: #{tpu_custom_call.1} parent=1 // pred_fallthru
      _
    // Predicated region
    $region14: #{tpu_custom_call.1} parent=1 // pred_check
      _
    $region15: #{tpu_custom_call.1} parent=1 // pred_check_branch
      %41 = sbr.rel (0) target = $region17
    $region16: #{tpu_custom_call.1} parent=1 // pred_region
      %43 = dma.done [#allocation4], 64
    $region17: #{tpu_custom_call.1} parent=1 // pred_fallthru
      _
    %44 = vsyncpa [#allocation3], 1
    %45 = vsyncpa [#allocation4], 1

</llo_original>
